<compile_context>
chip_gen: v7x
topology: tpu7x:2x2x1
jax: 0.10.0
libtpu: 0.0.40
codegen_flags: <defaults>
</compile_context>

<pallas_src>
import jax
import jax.numpy as jnp
from jax.experimental import pallas as pl
from jax.experimental.pallas import tpu as pltpu


def _linear_kernel(x_ref, w_ref, b_ref, o_ref):
    # MXU matmul with f32 accumulation + broadcasted bias add, all in VMEM.
    acc = jnp.dot(x_ref[...], w_ref[...], preferred_element_type=jnp.float32)
    o_ref[...] = (acc + b_ref[...]).astype(o_ref.dtype)


def polynomial_regression_forward(x, weight, bias, *, tile_b: int = 1024):
    """Forward pass of nn.Linear(input_dim, 3).

    x:      (B, D)  float32
    weight: (3, D)  float32   (PyTorch layout)
    bias:   (3,)    float32
    returns (B, 3)  float32
    """
    B, D = x.shape
    out_dim = weight.shape[0]

    w_t = weight.T                      # (D, out_dim) — cheap host/XLA-side glue
    b2 = bias.reshape(1, out_dim)       # (1, out_dim) for in-kernel broadcast

    # Batch tile: full array if it fits in one tile (covers the toy sizes and
    # keeps the block shape == full dim, satisfying the (8,128) rule); otherwise
    # a sublane-aligned tile. Pallas masks the partial last block automatically.
    tb = B if B <= tile_b else tile_b   # tile_b is a multiple of 8
    grid = (pl.cdiv(B, tb),)

    return pl.pallas_call(
        _linear_kernel,
        out_shape=jax.ShapeDtypeStruct((B, out_dim), x.dtype),
        grid_spec=pl.GridSpec(
            grid=grid,
            in_specs=[
                # x: streamed batch tiles (double-buffered by the pipeline).
                pl.BlockSpec((tb, D), lambda i: (i, 0)),
                # weight / bias: constant block index -> stay VMEM-resident.
                pl.BlockSpec((D, out_dim), lambda i: (0, 0)),
                pl.BlockSpec((1, out_dim), lambda i: (0, 0)),
            ],
            out_specs=pl.BlockSpec((tb, out_dim), lambda i: (i, 0)),
        ),
        compiler_params=pltpu.CompilerParams(
            # Batch axis is embarrassingly parallel: lets v7x shard it across
            # its 2 TensorCores; neutral on single-TC v5e/v6e.
            dimension_semantics=("parallel",),
        ),
    )(x, w_t, b2)


if __name__ == "__main__":
    key = jax.random.PRNGKey(0)
    k_x, k_w, k_b, k_x2 = jax.random.split(key, 4)

    batch = 8
    input_dim = 32
    out_dim = 3

    # Deterministic parameter init (mimics PyTorch's U(-1/sqrt(D), 1/sqrt(D)))
    bound = 1.0 / (input_dim ** 0.5)
    weight = jax.random.uniform(k_w, (out_dim, input_dim),
                                minval=-bound, maxval=bound,
                                dtype=jnp.float32)
    bias = jax.random.uniform(k_b, (out_dim,),
                              minval=-bound, maxval=bound,
                              dtype=jnp.float32)

    # Small demo batch (single-block path).
    x = jax.random.normal(k_x, (batch, input_dim), dtype=jnp.float32)
    out = polynomial_regression_forward(x, weight, bias)
    out = jax.block_until_ready(out)
    ref = x @ weight.T + bias
    assert out.shape == (batch, out_dim)
    assert jnp.allclose(out, ref, atol=1e-5, rtol=1e-5)

    # Larger batch to exercise the tiled / pipelined path (incl. partial tile).
    big_batch = 2048 + 64
    x_big = jax.random.normal(k_x2, (big_batch, input_dim), dtype=jnp.float32)
    out_big = polynomial_regression_forward(x_big, weight, bias, tile_b=1024)
    out_big = jax.block_until_ready(out_big)
    ref_big = x_big @ weight.T + bias
    assert out_big.shape == (big_batch, out_dim)
    assert jnp.allclose(out_big, ref_big, atol=1e-5, rtol=1e-5)

    print("KERNEL_OK")
</pallas_src>

<mosaic_0001>
module attributes {stable_mosaic.version = 11 : i64} {
  func.func @_linear_kernel(%arg0: i32, %arg1: memref<8x32xf32, #tpu.memory_space<vmem>>, %arg2: memref<32x3xf32, #tpu.memory_space<vmem>>, %arg3: memref<1x3xf32, #tpu.memory_space<vmem>>, %arg4: memref<8x3xf32, #tpu.memory_space<vmem>>) attributes {dimension_semantics = [#tpu.dimension_semantics<parallel>], iteration_bounds = array<i64: 1>, scalar_prefetch = 0 : i64, scratch_operands = 0 : i64, tpu.core_type = #tpu.core_type<tc>, window_params = [{transform_indices = @transform_0, window_bounds = array<i64: 8, 32>}, {pipeline_mode = #tpu.pipeline_mode<synchronous>, transform_indices = @transform_1, window_bounds = array<i64: 32, 3>}, {pipeline_mode = #tpu.pipeline_mode<synchronous>, transform_indices = @transform_2, window_bounds = array<i64: 1, 3>}, {transform_indices = @transform_3, window_bounds = array<i64: 8, 3>}]} {
    %c0 = arith.constant 0 : index
    %c0_0 = arith.constant 0 : index
    %0 = vector.load %arg1[%c0, %c0_0] : memref<8x32xf32, #tpu.memory_space<vmem>>, vector<8x32xf32>
    %c0_1 = arith.constant 0 : index
    %c0_2 = arith.constant 0 : index
    %1 = vector.load %arg2[%c0_1, %c0_2] : memref<32x3xf32, #tpu.memory_space<vmem>>, vector<32x3xf32>
    %cst = arith.constant dense<0.000000e+00> : vector<8x3xf32>
    %2 = tpu.matmul %0, %1, %cst {dimension_numbers = #tpu.dot_dimension_numbers<[1], [0], [0], [1], [0, 0, 1, 1], [], []>} : vector<8x32xf32>, vector<32x3xf32>, vector<8x3xf32> -> vector<8x3xf32>
    %c0_3 = arith.constant 0 : index
    %c0_4 = arith.constant 0 : index
    %3 = vector.load %arg3[%c0_3, %c0_4] : memref<1x3xf32, #tpu.memory_space<vmem>>, vector<1x3xf32>
    %4 = vector.broadcast %3 : vector<1x3xf32> to vector<8x3xf32>
    %5 = arith.addf %2, %4 : vector<8x3xf32>
    %c0_5 = arith.constant 0 : index
    %c0_6 = arith.constant 0 : index
    %6 = vector.load %arg4[%c0_5, %c0_6] : memref<8x3xf32, #tpu.memory_space<vmem>>, vector<8x3xf32>
    tpu.vector_store %arg4[%c0_5, %c0_6], %5 {strides = array<i32>} : memref<8x3xf32, #tpu.memory_space<vmem>>, vector<8x3xf32>,
    return
  }
  func.func @transform_0(%arg0: i32) -> (i32, i32) {
    %c0_i32 = arith.constant 0 : i32
    %c0_i32_0 = arith.constant 0 : i32
    return %arg0, %c0_i32 : i32, i32
  }
  func.func @transform_1(%arg0: i32) -> (i32, i32) {
    %c0_i32 = arith.constant 0 : i32
    %c0_i32_0 = arith.constant 0 : i32
    %c0_i32_1 = arith.constant 0 : i32
    return %c0_i32, %c0_i32_0 : i32, i32
  }
  func.func @transform_2(%arg0: i32) -> (i32, i32) {
    %c0_i32 = arith.constant 0 : i32
    %c0_i32_0 = arith.constant 0 : i32
    %c0_i32_1 = arith.constant 0 : i32
    return %c0_i32, %c0_i32_0 : i32, i32
  }
  func.func @transform_3(%arg0: i32) -> (i32, i32) {
    %c0_i32 = arith.constant 0 : i32
    %c0_i32_0 = arith.constant 0 : i32
    return %arg0, %c0_i32 : i32, i32
  }
}

</mosaic_0001>

<llo_original>
// kernel: tpu_custom_call.1
$region0: #{tpu_custom_call.1}
  #allocation0 [shape = 'u32[]', space=smem, size = 0x4, offset = 0x4, fixed_abs, tag = 'smem constant byte address 0x4 - core index']
  #allocation1 [shape = 'u32[144,128]{1,0:T(1,128)}', space=vmem, size = 0x12000, scoped, tag = 'internal scratch']
  %s0 = inlined_call_operand.vmem [shape: f32[8,32], index: 0, kind: input, shape index: {}]
  %s1 = inlined_call_operand.vmem [shape: f32[32,3], index: 1, kind: input, shape index: {}]
  %s2 = inlined_call_operand.vmem [shape: f32[1,3], index: 2, kind: input, shape index: {}]
  %s3 = inlined_call_operand.vmem [shape: f32[8,3], index: 3, kind: output, shape index: {}]
  %s4 = sld [smem:[#allocation0]]
  $region22: #{tpu_custom_call.1} parent=0
    _
  %s6 = ssub.s32 1, %s4
  %s7 = scalar_select 0, %s6, %s4
  // Predicated region
  $region2: #{tpu_custom_call.1} parent=0 // pred_check
    _
  $region3: #{tpu_custom_call.1} parent=0 // pred_check_branch
    %9 = sbr.rel (0) target = $region5
  $region4: #{tpu_custom_call.1} parent=0 // pred_region
    _
  $region5: #{tpu_custom_call.1} parent=0 // pred_fallthru
    _
  // Predicated region
  $region6: #{tpu_custom_call.1} parent=0 // pred_check
    _
  $region7: #{tpu_custom_call.1} parent=0 // pred_check_branch
    %11 = sbr.rel (0) target = $region9
  $region8: #{tpu_custom_call.1} parent=0 // pred_region
    _
  $region9: #{tpu_custom_call.1} parent=0 // pred_fallthru
    _
  // Predicated region
  $region10: #{tpu_custom_call.1} parent=0 // pred_check
    _
  $region11: #{tpu_custom_call.1} parent=0 // pred_check_branch
    %13 = sbr.rel (0) target = $region13
  $region12: #{tpu_custom_call.1} parent=0 // pred_region
    _
  $region13: #{tpu_custom_call.1} parent=0 // pred_fallthru
    _
  %v14 = vld [vmem:[%s0] sm:$0xff]
  %v15 = vld [vmem:[%s1] sm:$0xff]
  %v16 = vld [vmem:[%s1 + $0x8] sm:$0xff]
  %v17 = vld [vmem:[%s1 + $0x10] sm:$0xff]
  %v18 = vld [vmem:[%s1 + $0x18] sm:$0xff]
  %v19 = vld [vmem:[%s2] sm:$0x1]
  %v21 = vlaneseq
  %v22 = vshrl.u32 %v21, 7
  %v23 = vsub.s32 0, %v22
  %v24 = vrot.slane %v19, %v23
  %vm26 = vcmask 261120
  %v28 = vsel %vm26, %v14, 0
  %30 = vmatprep.subr.mxu0 0.0
  %31 = vmatpush1.msra.mxu0 %v15
  %32 = vmatprep.subr.mxu0 0.0
  %33 = vmatpush1.msra.mxu0 %v16
  %34 = vmatprep.subr.mxu0 0.0
  %35 = vmatpush1.msra.mxu0 %v17
  %36 = vmatprep.subr.mxu0 0.0
  %37 = vmatpush1.msra.mxu0 %v18
  %38 = vmatprep.subr.mxu0 0.0
  %39 = vmatpush1.msra.mxu0 0.0
  %40 = vmatprep.subr.mxu0 0.0
  %41 = vmatpush1.msra.mxu0 0.0
  %42 = vmatprep.subr.mxu0 0.0
  %43 = vmatpush1.msra.mxu0 0.0
  %44 = vmatprep.subr.mxu0 0.0
  %45 = vmatpush1.msra.mxu0 0.0
  %46 = vmatprep.subr.mxu0 0.0
  %47 = vmatpush1.msra.mxu0 0.0
  %48 = vmatprep.subr.mxu0 0.0
  %49 = vmatpush1.msra.mxu0 0.0
  %50 = vmatprep.subr.mxu0 0.0
  %51 = vmatpush1.msra.mxu0 0.0
  %52 = vmatprep.subr.mxu0 0.0
  %53 = vmatpush1.msra.mxu0 0.0
  %54 = vmatprep.subr.mxu0 0.0
  %55 = vmatpush1.msra.mxu0 0.0
  %56 = vmatprep.subr.mxu0 0.0
  %57 = vmatpush1.msra.mxu0 0.0
  %58 = vmatprep.subr.mxu0 0.0
  %59 = vmatpush1.msra.mxu0 0.0
  %60 = vmatprep.subr.mxu0 0.0
  %61 = vmatpush1.msra.mxu0 0.0
  %62 = vmatprep.subr.mxu0 0.0
  %63 = vmatpush1.msra.mxu0 0.0
  %64 = vmatprep.subr.mxu0 0.0
  %65 = vmatpush1.msra.mxu0 0.0
  %66 = vmatprep.subr.mxu0 0.0
  %67 = vmatpush1.msra.mxu0 0.0
  %68 = vmatprep.subr.mxu0 0.0
  %69 = vmatpush1.msra.mxu0 0.0
  %70 = vmatprep.subr.mxu0 0.0
  %71 = vmatpush1.msra.mxu0 0.0
  %72 = vmatprep.subr.mxu0 0.0
  %73 = vmatpush1.msra.mxu0 0.0
  %74 = vmatprep.subr.mxu0 0.0
  %75 = vmatpush1.msra.mxu0 0.0
  %76 = vmatprep.subr.mxu0 0.0
  %77 = vmatpush1.msra.mxu0 0.0
  %78 = vmatprep.subr.mxu0 0.0
  %79 = vmatpush1.msra.mxu0 0.0
  %80 = vmatprep.subr.mxu0 0.0
  %81 = vmatpush1.msra.mxu0 0.0
  %82 = vmatprep.subr.mxu0 0.0
  %83 = vmatpush1.msra.mxu0 0.0
  %84 = vmatprep.subr.mxu0 0.0
  %85 = vmatpush1.msra.mxu0 0.0
  %86 = vmatprep.subr.mxu0 0.0
  %87 = vmatpush1.msra.mxu0 0.0
  %88 = vmatprep.subr.mxu0 0.0
  %89 = vmatpush1.msra.mxu0 0.0
  %90 = vmatprep.subr.mxu0 0.0
  %91 = vmatpush1.msra.mxu0 0.0
  %92 = vmatprep.subr.mxu0 0.0
  %93 = vmatpush1.msra.mxu0 0.0
  %94 = vmatprep.mubr.f32.mxu0 0.0
  %95 = vmatmul.mubr.f32.gmra.mrb[0].mxu0 %v28
  %v96 = vpop.f32.mrb[0].mxu0
  %v97 = vadd.f32 %v24, %v96
  %v98 = vpop.f32.mrb[0].mxu0
  %99 = vdwg.mxu0
  %vm100 = vcmask 23552
  %101 = vst.msk [vmem:[%s3] sm:$0xff] %vm100, %v97
  // Predicated region
  $region14: #{tpu_custom_call.1} parent=0 // pred_check
    _
  $region15: #{tpu_custom_call.1} parent=0 // pred_check_branch
    %103 = sbr.rel (0) target = $region17
  $region16: #{tpu_custom_call.1} parent=0 // pred_region
    _
  $region17: #{tpu_custom_call.1} parent=0 // pred_fallthru
    _
  // Predicated region
  $region18: #{tpu_custom_call.1} parent=0 // pred_check
    _
  $region19: #{tpu_custom_call.1} parent=0 // pred_check_branch
    %105 = sbr.rel (0) target = $region21
  $region20: #{tpu_custom_call.1} parent=0 // pred_region
    _
  $region21: #{tpu_custom_call.1} parent=0 // pred_fallthru
    _

</llo_original>
